<compile_context>
chip_gen: v7x
topology: tpu7x:2x2x1
jax: 0.10.0
libtpu: 0.0.40
codegen_flags: <defaults>
</compile_context>

<pallas_src>
import functools

import jax
import jax.numpy as jnp
from jax.experimental import pallas as pl
from jax.experimental.pallas import tpu as pltpu

_LANES = 128
_SUBLANES = 8                 # f32 vreg sublanes; tree-partial shape is (8, 128)
_ROW_ALIGN = 16               # keeps bf16 (16,128) tiling happy for sub-blocks
_MAX_BLOCK_ROWS = 8192        # 8192 x 128 f32 = 4 MiB per input block
_VMEM_LIMIT = 32 * 1024 * 1024


def _num_cores():
    """Best-effort TensorCore count; wrong guesses only cost perf, not correctness."""
    try:
        kind = jax.devices()[0].device_kind.lower()
    except Exception:  # pragma: no cover - defensive
        return 1
    for tag in ("v4", "v5p", "v7"):
        if tag in kind:
            return 2
    return 1


def _dice_kernel(x_ref, t_ref, out_i_ref, out_d_ref, *,
                 block_rows, n_valid, inner, needs_mask):
    c = pl.program_id(0)          # split axis ("parallel"; shards on multi-TC chips)
    i = pl.program_id(1)          # reduction axis ("arbitrary")

    @pl.when(i == 0)
    def _init():
        out_i_ref[...] = jnp.zeros_like(out_i_ref)
        out_d_ref[...] = jnp.zeros_like(out_d_ref)

    # sigmoid(logits) in f32; clamp to [0,1] afterwards is mathematically a no-op.
    s = jax.nn.sigmoid(x_ref[...].astype(jnp.float32))
    t = t_ref[...].astype(jnp.float32)

    def _tree(v):
        # (block_rows, 128) -> (block_rows//8, 8, 128); leading-axis sum lowers
        # to plain VPU vreg adds (no cross-lane/XLU work in the hot loop).
        return v.reshape(-1, _SUBLANES, _LANES).sum(axis=0)

    def _accumulate(si, ti):
        out_i_ref[...] += _tree(si * ti)          # -> intersection partial
        out_d_ref[...] += _tree(si) + _tree(ti)   # -> sum(inputs)+sum(targets) partial

    if needs_mask:
        block_elems = block_rows * _LANES
        elem0 = (c * inner + i) * block_elems     # logical flat offset of this block
        is_tail = (elem0 + block_elems) > n_valid

        @pl.when(jnp.logical_not(is_tail))
        def _full_block():
            _accumulate(s, t)

        @pl.when(is_tail)
        def _tail_block():
            # Element-granular validity mask: only the boundary block pays this.
            rid = jax.lax.broadcasted_iota(jnp.int32, s.shape, 0)
            cid = jax.lax.broadcasted_iota(jnp.int32, s.shape, 1)
            valid = (rid * _LANES + cid) < (n_valid - elem0)
            _accumulate(jnp.where(valid, s, 0.0), jnp.where(valid, t, 0.0))
    else:
        _accumulate(s, t)


def dice_loss(inputs, targets, smooth=1.0, *, block_rows=None, splits=None):
    """Pallas TPU implementation of DiceLoss.forward. Returns a scalar f32."""
    x = jnp.asarray(inputs)
    t = jnp.asarray(targets)
    # bf16 passes through (exact for {0,1} masks, halves HBM bytes); everything
    # else upcast to f32 to match the reference semantics.
    if x.dtype not in (jnp.float32, jnp.bfloat16):
        x = x.astype(jnp.float32)
    if t.dtype not in (jnp.float32, jnp.bfloat16):
        t = t.astype(jnp.float32)

    x = x.reshape(-1)
    t = t.reshape(-1)
    assert x.shape == t.shape, "inputs and targets must have the same #elements"
    n = x.shape[0]

    # Zero-copy reshape to (rows, 128) in the common aligned case; tiny pad
    # (< 2048 elements, values irrelevant because the kernel masks against n)
    # only when n is not a multiple of 16*128.
    # TODO(synk): a fully zero-copy unaligned path would need 1-D block layouts.
    pad = (-n) % (_ROW_ALIGN * _LANES)
    if pad:
        x = jnp.pad(x, (0, pad))
        t = jnp.pad(t, (0, pad))
    rows = (n + pad) // _LANES
    x2 = x.reshape(rows, _LANES)
    t2 = t.reshape(rows, _LANES)

    if block_rows is None:
        block_rows = _MAX_BLOCK_ROWS
    block_rows = max(_ROW_ALIGN, (block_rows // _ROW_ALIGN) * _ROW_ALIGN)
    block_rows = min(block_rows, rows)            # rows is a multiple of 16
    total_blocks = pl.cdiv(rows, block_rows)

    if splits is None:
        splits = _num_cores()
    splits = max(1, min(splits, total_blocks))
    inner = pl.cdiv(total_blocks, splits)

    needs_mask = (splits * inner * block_rows * _LANES) != n

    kernel = functools.partial(
        _dice_kernel,
        block_rows=block_rows,
        n_valid=n,
        inner=inner,
        needs_mask=needs_mask,
    )

    last_block = total_blocks - 1
    # Clamp so a wholly out-of-range block (odd total_blocks split 2 ways) just
    # re-reads the last block; its contribution is fully masked in-kernel.
    in_map = lambda c, i: (jnp.minimum(c * inner + i, last_block), 0)
    out_map = lambda c, i: (c, 0, 0)

    out_i, out_d = pl.pallas_call(
        kernel,
        out_shape=(
            jax.ShapeDtypeStruct((splits, _SUBLANES, _LANES), jnp.float32),
            jax.ShapeDtypeStruct((splits, _SUBLANES, _LANES), jnp.float32),
        ),
        grid_spec=pltpu.PrefetchScalarGridSpec(
            num_scalar_prefetch=0,
            grid=(splits, inner),
            in_specs=[
                pl.BlockSpec((block_rows, _LANES), in_map),
                pl.BlockSpec((block_rows, _LANES), in_map),
            ],
            out_specs=[
                pl.BlockSpec((None, _SUBLANES, _LANES), out_map),
                pl.BlockSpec((None, _SUBLANES, _LANES), out_map),
            ],
        ),
        compiler_params=pltpu.CompilerParams(
            dimension_semantics=("parallel", "arbitrary"),
            vmem_limit_bytes=_VMEM_LIMIT,
        ),
    )(x2, t2)

    # Tiny finalize (splits * 8 * 128 partials per quantity) done in XLA.
    inter = jnp.sum(out_i)
    denom = jnp.sum(out_d)
    smooth = jnp.float32(smooth)
    dice = (2.0 * inter + smooth) / (denom + smooth)
    return (1.0 - dice).astype(jnp.float32)


def _dice_loss_ref(inputs, targets, smooth=1.0):
    s = jnp.clip(jax.nn.sigmoid(inputs.astype(jnp.float32)), 0.0, 1.0).reshape(-1)
    t = targets.astype(jnp.float32).reshape(-1)
    inter = jnp.sum(s * t)
    dice = (2.0 * inter + smooth) / (jnp.sum(s) + jnp.sum(t) + smooth)
    return 1.0 - dice


if __name__ == "__main__":
    key = jax.random.PRNGKey(0)
    k1, k2, k3, k4, k5, k6 = jax.random.split(key, 6)

    # 1) Main case: small segmentation head (B=2, C=4, 16x16) f32 logits,
    #    bf16 {0,1} mask (exact; exercises the narrow-target HBM path and the
    #    unmasked fast path).
    x1 = jax.random.normal(k1, (2, 4, 16, 16), dtype=jnp.float32)
    t1 = (jax.random.uniform(k2, (2, 4, 16, 16)) > 0.5).astype(jnp.bfloat16)
    out1 = jax.block_until_ready(dice_loss(x1, t1, smooth=1.0))
    ref1 = _dice_loss_ref(x1, t1, smooth=1.0)
    assert jnp.allclose(out1, ref1, rtol=1e-5, atol=1e-5), (out1, ref1)

    # 2) Unaligned element count (2*3*9*9 = 486) -> exercises the in-kernel
    #    element-granular tail mask (no semantic dependence on pad values).
    x2 = jax.random.normal(k3, (2, 3, 9, 9), dtype=jnp.float32)
    t2 = (jax.random.uniform(k4, (2, 3, 9, 9)) > 0.5).astype(jnp.float32)
    out2 = jax.block_until_ready(dice_loss(x2, t2, smooth=1.0))
    ref2 = _dice_loss_ref(x2, t2, smooth=1.0)
    assert jnp.allclose(out2, ref2, rtol=1e-5, atol=1e-5), (out2, ref2)

    # 3) Multi-block, forced 2-way split -> exercises the init/accumulate path,
    #    the clamped index_map and a fully-masked trailing block.
    x3 = jax.random.normal(k5, (2, 3, 32, 32), dtype=jnp.float32)
    t3 = (jax.random.uniform(k6, (2, 3, 32, 32)) > 0.5).astype(jnp.bfloat16)
    out3 = jax.block_until_ready(
        dice_loss(x3, t3, smooth=1.0, block_rows=16, splits=2))
    ref3 = _dice_loss_ref(x3, t3, smooth=1.0)
    assert jnp.allclose(out3, ref3, rtol=1e-5, atol=1e-5), (out3, ref3)

    print("KERNEL_OK")
</pallas_src>

<mosaic_0001>
module attributes {stable_mosaic.version = 11 : i64} {
  func.func @_dice_kernel(%arg0: i32, %arg1: i32, %arg2: memref<16x128xf32, #tpu.memory_space<vmem>>, %arg3: memref<16x128xbf16, #tpu.memory_space<vmem>>, %arg4: memref<1x8x128xf32, #tpu.memory_space<vmem>>, %arg5: memref<1x8x128xf32, #tpu.memory_space<vmem>>) attributes {dimension_semantics = [#tpu.dimension_semantics<parallel>, #tpu.dimension_semantics<arbitrary>], iteration_bounds = array<i64: 1, 1>, scalar_prefetch = 0 : i64, scratch_operands = 0 : i64, tpu.core_type = #tpu.core_type<tc>, window_params = [{transform_indices = @transform_0, window_bounds = array<i64: 16, 128>}, {transform_indices = @transform_1, window_bounds = array<i64: 16, 128>}, {transform_indices = @transform_2, window_bounds = array<i64: 1, 8, 128>}, {transform_indices = @transform_3, window_bounds = array<i64: 1, 8, 128>}]} {
    %c0_i32 = arith.constant 0 : i32
    %0 = arith.cmpi eq, %arg1, %c0_i32 : i32
    %1 = arith.extui %0 : i1 to i32
    %c0_i32_0 = arith.constant 0 : i32
    %2 = arith.cmpi ne, %1, %c0_i32_0 : i32
    scf.if %2 {
      %cst_19 = arith.constant 0.000000e+00 : f32
      %31 = vector.broadcast %cst_19 : f32 to vector<8x128xf32>
      %c0_20 = arith.constant 0 : index
      %c0_21 = arith.constant 0 : index
      %c0_22 = arith.constant 0 : index
      %32 = vector.load %arg4[%c0_20, %c0_21, %c0_22] : memref<1x8x128xf32, #tpu.memory_space<vmem>>, vector<1x8x128xf32>
      %33 = vector.shape_cast %32 : vector<1x8x128xf32> to vector<8x128xf32>
      %34 = vector.shape_cast %31 : vector<8x128xf32> to vector<1x8x128xf32>
      tpu.vector_store %arg4[%c0_20, %c0_21, %c0_22], %34 {strides = array<i32>} : memref<1x8x128xf32, #tpu.memory_space<vmem>>, vector<1x8x128xf32>,
      %cst_23 = arith.constant 0.000000e+00 : f32
      %35 = vector.broadcast %cst_23 : f32 to vector<8x128xf32>
      %c0_24 = arith.constant 0 : index
      %c0_25 = arith.constant 0 : index
      %c0_26 = arith.constant 0 : index
      %36 = vector.load %arg5[%c0_24, %c0_25, %c0_26] : memref<1x8x128xf32, #tpu.memory_space<vmem>>, vector<1x8x128xf32>
      %37 = vector.shape_cast %36 : vector<1x8x128xf32> to vector<8x128xf32>
      %38 = vector.shape_cast %35 : vector<8x128xf32> to vector<1x8x128xf32>
      tpu.vector_store %arg5[%c0_24, %c0_25, %c0_26], %38 {strides = array<i32>} : memref<1x8x128xf32, #tpu.memory_space<vmem>>, vector<1x8x128xf32>,
    } else {
    }
    %c0 = arith.constant 0 : index
    %c0_1 = arith.constant 0 : index
    %3 = vector.load %arg2[%c0, %c0_1] : memref<16x128xf32, #tpu.memory_space<vmem>>, vector<16x128xf32>
    %4 = arith.negf %3 : vector<16x128xf32>
    %5 = math.exp %4 : vector<16x128xf32>
    %cst = arith.constant 1.000000e+00 : f32
    %6 = vector.broadcast %cst : f32 to vector<16x128xf32>
    %7 = arith.addf %6, %5 : vector<16x128xf32>
    %8 = arith.divf %6, %7 : vector<16x128xf32>
    %c0_2 = arith.constant 0 : index
    %c0_3 = arith.constant 0 : index
    %9 = vector.load %arg3[%c0_2, %c0_3] : memref<16x128xbf16, #tpu.memory_space<vmem>>, vector<16x128xbf16>
    %10 = arith.extf %9 : vector<16x128xbf16> to vector<16x128xf32>
    %c0_4 = arith.constant 0 : index
    %c0_5 = arith.constant 0 : index
    %c0_6 = arith.constant 0 : index
    %11 = vector.load %arg4[%c0_4, %c0_5, %c0_6] : memref<1x8x128xf32, #tpu.memory_space<vmem>>, vector<1x8x128xf32>
    %12 = vector.shape_cast %11 : vector<1x8x128xf32> to vector<8x128xf32>
    %13 = arith.mulf %8, %10 : vector<16x128xf32>
    %14 = vector.shape_cast %13 : vector<16x128xf32> to vector<2x8x128xf32>
    %cst_7 = arith.constant dense<0.000000e+00> : vector<8x128xf32>
    %15 = vector.multi_reduction <add>, %14, %cst_7 [0] : vector<2x8x128xf32> to vector<8x128xf32>
    %16 = arith.addf %12, %15 : vector<8x128xf32>
    %c0_8 = arith.constant 0 : index
    %c0_9 = arith.constant 0 : index
    %c0_10 = arith.constant 0 : index
    %17 = vector.load %arg4[%c0_8, %c0_9, %c0_10] : memref<1x8x128xf32, #tpu.memory_space<vmem>>, vector<1x8x128xf32>
    %18 = vector.shape_cast %17 : vector<1x8x128xf32> to vector<8x128xf32>
    %19 = vector.shape_cast %16 : vector<8x128xf32> to vector<1x8x128xf32>
    tpu.vector_store %arg4[%c0_8, %c0_9, %c0_10], %19 {strides = array<i32>} : memref<1x8x128xf32, #tpu.memory_space<vmem>>, vector<1x8x128xf32>,
    %c0_11 = arith.constant 0 : index
    %c0_12 = arith.constant 0 : index
    %c0_13 = arith.constant 0 : index
    %20 = vector.load %arg5[%c0_11, %c0_12, %c0_13] : memref<1x8x128xf32, #tpu.memory_space<vmem>>, vector<1x8x128xf32>
    %21 = vector.shape_cast %20 : vector<1x8x128xf32> to vector<8x128xf32>
    %22 = vector.shape_cast %8 : vector<16x128xf32> to vector<2x8x128xf32>
    %cst_14 = arith.constant dense<0.000000e+00> : vector<8x128xf32>
    %23 = vector.multi_reduction <add>, %22, %cst_14 [0] : vector<2x8x128xf32> to vector<8x128xf32>
    %24 = vector.shape_cast %10 : vector<16x128xf32> to vector<2x8x128xf32>
    %cst_15 = arith.constant dense<0.000000e+00> : vector<8x128xf32>
    %25 = vector.multi_reduction <add>, %24, %cst_15 [0] : vector<2x8x128xf32> to vector<8x128xf32>
    %26 = arith.addf %23, %25 : vector<8x128xf32>
    %27 = arith.addf %21, %26 : vector<8x128xf32>
    %c0_16 = arith.constant 0 : index
    %c0_17 = arith.constant 0 : index
    %c0_18 = arith.constant 0 : index
    %28 = vector.load %arg5[%c0_16, %c0_17, %c0_18] : memref<1x8x128xf32, #tpu.memory_space<vmem>>, vector<1x8x128xf32>
    %29 = vector.shape_cast %28 : vector<1x8x128xf32> to vector<8x128xf32>
    %30 = vector.shape_cast %27 : vector<8x128xf32> to vector<1x8x128xf32>
    tpu.vector_store %arg5[%c0_16, %c0_17, %c0_18], %30 {strides = array<i32>} : memref<1x8x128xf32, #tpu.memory_space<vmem>>, vector<1x8x128xf32>,
    return
  }
  func.func @transform_0(%arg0: i32, %arg1: i32) -> (i32, i32) {
    %c1_i32 = arith.constant 1 : i32
    %0 = arith.muli %arg0, %c1_i32 : i32
    %1 = arith.addi %0, %arg1 : i32
    %c0_i32 = arith.constant 0 : i32
    %2 = arith.minsi %1, %c0_i32 : i32
    %c0_i32_0 = arith.constant 0 : i32
    %c0_i32_1 = arith.constant 0 : i32
    return %2, %c0_i32_0 : i32, i32
  }
  func.func @transform_1(%arg0: i32, %arg1: i32) -> (i32, i32) {
    %c1_i32 = arith.constant 1 : i32
    %0 = arith.muli %arg0, %c1_i32 : i32
    %1 = arith.addi %0, %arg1 : i32
    %c0_i32 = arith.constant 0 : i32
    %2 = arith.minsi %1, %c0_i32 : i32
    %c0_i32_0 = arith.constant 0 : i32
    %c0_i32_1 = arith.constant 0 : i32
    return %2, %c0_i32_0 : i32, i32
  }
  func.func @transform_2(%arg0: i32, %arg1: i32) -> (i32, i32, i32) {
    %c0_i32 = arith.constant 0 : i32
    %c0_i32_0 = arith.constant 0 : i32
    %c0_i32_1 = arith.constant 0 : i32
    return %arg0, %c0_i32, %c0_i32_0 : i32, i32, i32
  }
  func.func @transform_3(%arg0: i32, %arg1: i32) -> (i32, i32, i32) {
    %c0_i32 = arith.constant 0 : i32
    %c0_i32_0 = arith.constant 0 : i32
    %c0_i32_1 = arith.constant 0 : i32
    return %arg0, %c0_i32, %c0_i32_0 : i32, i32, i32
  }
}

</mosaic_0001>

<llo_original>
// kernel: tpu_custom_call.1
$region0: #{tpu_custom_call.1}
  #allocation0 [shape = 'u32[]', space=smem, size = 0x4, offset = 0x4, fixed_abs, tag = 'smem constant byte address 0x4 - core index']
  #allocation1 [shape = 'u32[144,128]{1,0:T(1,128)}', space=vmem, size = 0x12000, scoped, tag = 'internal scratch']
  %s0 = inlined_call_operand.hbm [shape: f32[16,128], index: 0, kind: input, shape index: {}]
  %s1 = inlined_call_operand.hbm [shape: bf16[16,128], index: 1, kind: input, shape index: {}]
  %s2 = inlined_call_operand.hbm [shape: f32[1,8,128], index: 2, kind: output, shape index: {0}]
  %s3 = inlined_call_operand.hbm [shape: f32[1,8,128], index: 3, kind: output, shape index: {1}]
  %4 = xla_tuple %s2, %s3
  %s5 = sld [smem:[#allocation0]]
  $region38: #{tpu_custom_call.1} parent=0
    _
  %s7 = ssub.s32 1, %s5
  %s8 = scalar_select 0, %s7, %s5
  $region1: #{tpu_custom_call.1} parent=0
    #allocation2 [shape = 'u8[8192]{0}', space=vmem, size = 0x2000, scoped, tag = 'input window, operand 0, single buffered']
    #allocation3 [shape = 's32[1]{0}', space=sflag, size = 0x4, scoped, tag = 'scoped memory for tpu_custom_call.1']
    #allocation4 [shape = 's32[1]{0}', space=sflag, size = 0x4, scoped, tag = 'scoped memory for tpu_custom_call.1']
    #allocation5 [shape = 'u8[4096]{0}', space=vmem, size = 0x1000, scoped, tag = 'input window, operand 1, single buffered']
    #allocation6 [shape = 's32[1]{0}', space=sflag, size = 0x4, scoped, tag = 'scoped memory for tpu_custom_call.1']
    #allocation7 [shape = 'u8[4096]{0}', space=vmem, size = 0x1000, scoped, tag = 'output window, operand 0, single buffered']
    #allocation8 [shape = 'u8[4096]{0}', space=vmem, size = 0x1000, scoped, tag = 'output window, operand 1, single buffered']
    #allocation9 [shape = 's32[1]{0}', space=sflag, size = 0x4, scoped, tag = 'scoped memory for tpu_custom_call.1']
    %9 = vsyncpa [#allocation3], 0
    %10 = vsyncpa [#allocation6], 0
    %11 = vsyncpa [#allocation4], 0
    %12 = vsyncpa [#allocation9], 0
    // Predicated region
    $region2: #{tpu_custom_call.1} parent=1 // pred_check
      _
    $region3: #{tpu_custom_call.1} parent=1 // pred_check_branch
      %14 = sbr.rel (0) target = $region5
    $region4: #{tpu_custom_call.1} parent=1 // pred_region
      %s15 = sadd.s32 0, 0
      %p16 = scmp.lt.s32.totalorder %s15, 0
      %s17 = scalar_select %p16, %s15, 0
      %s18 = smul.u32 2, %s17
      %s20 = ssub.s32 256, 256
      %21 = vsyncadd [#allocation3], %s20
      %s22 = smul.addr %s18, 128
      %s23 = scalar_lea.hbm %s0, %s22
      %s24 = sshll.u32 [#allocation2], 4
      %s25 = int_to_ptr.vmem [resolvable:$true] %s24
      %30 = dma.hbm_to_vmem [thread:$0]  %s23, 256, %s25, [#allocation3], 128, 128, 8
    $region5: #{tpu_custom_call.1} parent=1 // pred_fallthru
      _
    // Predicated region
    $region6: #{tpu_custom_call.1} parent=1 // pred_check
      _
    $region7: #{tpu_custom_call.1} parent=1 // pred_check_branch
      %32 = sbr.rel (0) target = $region9
    $region8: #{tpu_custom_call.1} parent=1 // pred_region
      %s33 = sadd.s32 0, 0
      %p34 = scmp.lt.s32.totalorder %s33, 0
      %s35 = scalar_select %p34, %s33, 0
      %s36 = smul.u32 2, %s35
      %s38 = ssub.s32 128, 128
      %39 = vsyncadd [#allocation6], %s38
      %s40 = smul.addr %s36, 64
      %s41 = scalar_lea.hbm %s1, %s40
      %s42 = sshll.u32 [#allocation5], 4
      %s43 = int_to_ptr.vmem [resolvable:$true] %s42
      %48 = dma.hbm_to_vmem [thread:$0]  %s41, 128, %s43, [#allocation6], 64, 64, 4
    $region9: #{tpu_custom_call.1} parent=1 // pred_fallthru
      _
    // Predicated region
    $region10: #{tpu_custom_call.1} parent=1 // pred_check
      _
    $region11: #{tpu_custom_call.1} parent=1 // pred_check_branch
      %50 = sbr.rel (0) target = $region13
    $region12: #{tpu_custom_call.1} parent=1 // pred_region
      %51 = dma.done [#allocation3], 256
    $region13: #{tpu_custom_call.1} parent=1 // pred_fallthru
      _
    // Predicated region
    $region14: #{tpu_custom_call.1} parent=1 // pred_check
      _
    $region15: #{tpu_custom_call.1} parent=1 // pred_check_branch
      %53 = sbr.rel (0) target = $region17
    $region16: #{tpu_custom_call.1} parent=1 // pred_region
      %54 = dma.done [#allocation6], 128
    $region17: #{tpu_custom_call.1} parent=1 // pred_fallthru
      _
    %s55 = sadd.s32 0, 0
    %p56 = scmp.lt.s32.totalorder %s55, 0
    %s57 = scalar_select %p56, %s55, 0
    %s58 = smul.u32 2, %s57
    %s59 = sadd.s32 0, 0
    %p60 = scmp.lt.s32.totalorder %s59, 0
    %s61 = scalar_select %p60, %s59, 0
    %s62 = smul.u32 2, %s61
    %p63 = scmp.eq.s32.totalorder 0, 0
    // Predicated region
    $region18: #{tpu_custom_call.1} parent=1 // pred_check
      %p64 = pneg %p63
    $region19: #{tpu_custom_call.1} parent=1 // pred_check_branch
      %66 = sbr.rel (%p64) target = $region21
    $region20: #{tpu_custom_call.1} parent=1 // pred_region
      %67 = vst [vmem:[#allocation7] sm:$0xff] 0.0
      %68 = vst [vmem:[#allocation8] sm:$0xff] 0.0
    $region21: #{tpu_custom_call.1} parent=1 // pred_fallthru
      _
    %v69 = vld [vmem:[#allocation2] sm:$0xff]
    %v70 = vld [vmem:[#allocation2 + $0x8] sm:$0xff]
    %v71 = vxor.u32 %v69, 2147483648
    %v72 = vxor.u32 %v70, 2147483648
    %v73 = vmul.f32 %v71, 1.442695
    %v74 = vpow.pop %v73
    %v75 = vmul.f32 %v72, 1.442695
    %v76 = vpow.pop %v75
    %v77 = vadd.f32 %v74, 1.0
    %v78 = vadd.f32 %v76, 1.0
    %v79 = vrcp.pop %v77
    %v80 = vmul.f32 1.0, %v79
    %v81 = vrcp.pop %v78
    %v82 = vmul.f32 1.0, %v81
    %v83 = vld [vmem:[#allocation5] sm:$0xf]
    %v84 = vld [vmem:[#allocation5 + $0x4] sm:$0xf]
    %v85 = vunpack.c.l.bf16 %v83
    %v86 = vunpack.c.l.bf16 %v84
    %v87 = vld [vmem:[#allocation7] sm:$0xff]
    %v88 = vmul.f32 %v80, %v85
    %v89 = vmul.f32 %v82, %v86
    %v90 = vadd.f32 %v88, %v89
    %v91 = vadd.f32 %v87, %v90
    %92 = vst [vmem:[#allocation7] sm:$0xff] %v91
    %v93 = vld [vmem:[#allocation8] sm:$0xff]
    %v94 = vadd.f32 %v80, %v82
    %v95 = vadd.f32 %v85, %v86
    %v96 = vadd.f32 %v94, %v95
    %v97 = vadd.f32 %v93, %v96
    %98 = vst [vmem:[#allocation8] sm:$0xff] %v97
    // Predicated region
    $region22: #{tpu_custom_call.1} parent=1 // pred_check
      _
    $region23: #{tpu_custom_call.1} parent=1 // pred_check_branch
      %100 = sbr.rel (0) target = $region25
    $region24: #{tpu_custom_call.1} parent=1 // pred_region
      %s102 = ssub.s32 128, 128
      %103 = vsyncadd [#allocation4], %s102
      %s105 = sshll.u32 [#allocation7], 4
      %s106 = int_to_ptr.vmem [resolvable:$true] %s105
      %108 = dma.vmem_to_hbm [thread:$0]  %s106, 128, %s2, [#allocation4]
    $region25: #{tpu_custom_call.1} parent=1 // pred_fallthru
      _
    // Predicated region
    $region26: #{tpu_custom_call.1} parent=1 // pred_check
      _
    $region27: #{tpu_custom_call.1} parent=1 // pred_check_branch
      %110 = sbr.rel (0) target = $region29
    $region28: #{tpu_custom_call.1} parent=1 // pred_region
      %s112 = ssub.s32 128, 128
      %113 = vsyncadd [#allocation9], %s112
      %s115 = sshll.u32 [#allocation8], 4
      %s116 = int_to_ptr.vmem [resolvable:$true] %s115
      %118 = dma.vmem_to_hbm [thread:$0]  %s116, 128, %s3, [#allocation9]
    $region29: #{tpu_custom_call.1} parent=1 // pred_fallthru
      _
    // Predicated region
    $region30: #{tpu_custom_call.1} parent=1 // pred_check
      _
    $region31: #{tpu_custom_call.1} parent=1 // pred_check_branch
      %120 = sbr.rel (0) target = $region33
    $region32: #{tpu_custom_call.1} parent=1 // pred_region
      %121 = dma.done [#allocation4], 128
    $region33: #{tpu_custom_call.1} parent=1 // pred_fallthru
      _
    // Predicated region
    $region34: #{tpu_custom_call.1} parent=1 // pred_check
      _
    $region35: #{tpu_custom_call.1} parent=1 // pred_check_branch
      %123 = sbr.rel (0) target = $region37
    $region36: #{tpu_custom_call.1} parent=1 // pred_region
      %124 = dma.done [#allocation9], 128
    $region37: #{tpu_custom_call.1} parent=1 // pred_fallthru
      _
    %125 = vsyncpa [#allocation3], 1
    %126 = vsyncpa [#allocation6], 1
    %127 = vsyncpa [#allocation4], 1
    %128 = vsyncpa [#allocation9], 1

</llo_original>
